<compile_context>
chip_gen: v6e
topology: v6e:2x2x1
jax: 0.10.0
libtpu: 0.0.40
codegen_flags: <defaults>
</compile_context>

<pallas_src>
import functools

import jax
import jax.numpy as jnp
from jax.experimental import pallas as pl
from jax.experimental.pallas import tpu as pltpu


def _build_embedding(num_steps: int, dim: int) -> jnp.ndarray:
    """Replicates DiffusionEmbedding._build_embedding (dim = embedding_dim / 2)."""
    steps = jnp.arange(num_steps, dtype=jnp.float32)[:, None]                          # (num_steps, 1)
    freqs = 10.0 ** (jnp.arange(dim, dtype=jnp.float32) / (dim - 1) * 4.0)[None, :]    # (1, dim)
    table = steps * freqs                                                              # (num_steps, dim)
    return jnp.concatenate([jnp.sin(table), jnp.cos(table)], axis=1)                   # (num_steps, 2*dim)


def _round_up(x: int, m: int) -> int:
    return (x + m - 1) // m * m


# --------------------------------------------------------------------------------------
# Parameter preparation (done ONCE): fold Linear1 into the table, cast MXU operands.
# --------------------------------------------------------------------------------------
def prepare_diffusion_embedding_params(embedding_table, w1, b1, w2, b2,
                                       *, matmul_dtype=jnp.bfloat16):
    """Returns a params dict for diffusion_embedding_forward.

    T1 = embedding_table @ W1 is computed exactly in f32, then T1/W2 are cast once to
    `matmul_dtype` (default bf16: native/fast MXU on v5e/v6e/v7x, half the weight DMA).
    Biases stay f32 (bias add + SiLU run on the f32 VPU/EUP path -> v5e-safe).
    """
    num_steps, _ = embedding_table.shape
    proj = w1.shape[1]

    # Fold Linear1 into the table (gather commutes with the row-select).
    t1 = embedding_table.astype(jnp.float32) @ w1.astype(jnp.float32)   # (num_steps, proj), exact f32

    # Pad the step axis to a sublane multiple; padded rows are never selected (indices clamped).
    steps_padded = _round_up(num_steps, 8)
    if steps_padded != num_steps:
        t1 = jnp.pad(t1, ((0, steps_padded - num_steps), (0, 0)))

    return dict(
        t1=t1.astype(matmul_dtype),                       # (steps_padded, proj)
        b1=jnp.asarray(b1, jnp.float32).reshape(1, proj),
        w2=jnp.asarray(w2, matmul_dtype),                 # (proj, proj)
        b2=jnp.asarray(b2, jnp.float32).reshape(1, proj),
        num_steps=num_steps,
        matmul_dtype=matmul_dtype,
    )


# --------------------------------------------------------------------------------------
# Fused kernel: one-hot MXU gather (== gather + Linear1, W1 pre-folded) -> SiLU
#               -> Linear2 -> SiLU.  Grid-less, everything resident in VMEM.
# --------------------------------------------------------------------------------------
def _fused_kernel(step_ref,          # VMEM (B, 1) int32
                  t1_ref,            # VMEM (steps_padded, proj) matmul_dtype  (= table @ W1)
                  b1_ref,            # VMEM (1, proj) f32
                  w2_ref,            # VMEM (proj, proj) matmul_dtype
                  b2_ref,            # VMEM (1, proj) f32
                  o_ref,             # VMEM (B, proj) f32
                  *, num_steps: int, matmul_dtype):
    B = o_ref.shape[0]
    steps_padded = t1_ref.shape[0]

    # Clamp (no runtime OOB check on VMEM refs) and build the one-hot selector.
    step = jnp.clip(step_ref[...], 0, num_steps - 1)                       # (B, 1) int32
    iota = jax.lax.broadcasted_iota(jnp.int32, (B, steps_padded), 1)       # (B, steps_padded)
    onehot = (iota == step).astype(matmul_dtype)                           # (B, steps_padded)

    # Gather + Linear1 fused into one MXU matmul (f32 accumulation), bias + SiLU in f32.
    h = jnp.dot(onehot, t1_ref[...], preferred_element_type=jnp.float32) + b1_ref[...]
    h = h * jax.lax.logistic(h)                                            # SiLU on the EUP

    # Linear2 + SiLU.
    y = jnp.dot(h.astype(matmul_dtype), w2_ref[...],
                preferred_element_type=jnp.float32) + b2_ref[...]
    y = y * jax.lax.logistic(y)

    o_ref[...] = y.astype(o_ref.dtype)


def diffusion_embedding_forward(diffusion_step, params):
    """diffusion_step: (B,) int indices. params: from prepare_diffusion_embedding_params."""
    step = jnp.asarray(diffusion_step, jnp.int32).reshape(-1, 1)           # (B, 1)
    B = step.shape[0]
    proj = params["w2"].shape[1]

    kernel = functools.partial(_fused_kernel,
                               num_steps=params["num_steps"],
                               matmul_dtype=params["matmul_dtype"])

    vmem = pl.BlockSpec(memory_space=pltpu.MemorySpace.VMEM)               # whole-array, no double-buffer
    return pl.pallas_call(
        kernel,
        out_shape=jax.ShapeDtypeStruct((B, proj), jnp.float32),
        in_specs=[vmem] * 5,
        out_specs=vmem,
    )(step, params["t1"], params["b1"], params["w2"], params["b2"])


# --------------------------------------------------------------------------------------
# Precompute path: run the MLP over ALL num_steps rows once (exact f32); per-step forward
# in a denoising loop then degenerates to a plain row lookup (the biggest wall-clock win).
# --------------------------------------------------------------------------------------
def _mlp_all_steps_kernel(x_ref, w1_ref, b1_ref, w2_ref, b2_ref, o_ref):
    h = jnp.dot(x_ref[...], w1_ref[...], preferred_element_type=jnp.float32) + b1_ref[...]
    h = h * jax.lax.logistic(h)
    y = jnp.dot(h, w2_ref[...], preferred_element_type=jnp.float32) + b2_ref[...]
    y = y * jax.lax.logistic(y)
    o_ref[...] = y.astype(o_ref.dtype)


def precompute_all_step_embeddings(embedding_table, w1, b1, w2, b2):
    """Returns (num_steps, projection_dim) f32; hot-loop forward is then table[diffusion_step]."""
    num_steps, _ = embedding_table.shape
    proj = w2.shape[1]
    vmem = pl.BlockSpec(memory_space=pltpu.MemorySpace.VMEM)
    return pl.pallas_call(
        _mlp_all_steps_kernel,
        out_shape=jax.ShapeDtypeStruct((num_steps, proj), jnp.float32),
        in_specs=[vmem] * 5,
        out_specs=vmem,
    )(embedding_table.astype(jnp.float32),
      jnp.asarray(w1, jnp.float32),
      jnp.asarray(b1, jnp.float32).reshape(1, proj),
      jnp.asarray(w2, jnp.float32),
      jnp.asarray(b2, jnp.float32).reshape(1, proj))


def _reference_forward(diffusion_step, embedding_table, w1, b1, w2, b2):
    x = embedding_table[diffusion_step]
    x = x @ w1 + b1
    x = x * jax.nn.sigmoid(x)
    x = x @ w2 + b2
    x = x * jax.nn.sigmoid(x)
    return x


if __name__ == "__main__":
    # Module config (DiffusionEmbedding defaults, small num_steps / batch).
    num_steps = 50
    embedding_dim = 128
    projection_dim = 128
    B = 8  # number of diffusion-step indices queried at once

    # Deterministic parameter init (PyTorch Linear-style uniform(-1/sqrt(in), 1/sqrt(in))).
    key = jax.random.PRNGKey(0)
    k1, k2, k3, k4, k5 = jax.random.split(key, 5)
    s1 = 1.0 / jnp.sqrt(embedding_dim)
    s2 = 1.0 / jnp.sqrt(projection_dim)
    w1 = jax.random.uniform(k1, (embedding_dim, projection_dim), jnp.float32, -s1, s1)
    b1 = jax.random.uniform(k2, (projection_dim,), jnp.float32, -s1, s1)
    w2 = jax.random.uniform(k3, (projection_dim, projection_dim), jnp.float32, -s2, s2)
    b2 = jax.random.uniform(k4, (projection_dim,), jnp.float32, -s2, s2)

    embedding_table = _build_embedding(num_steps, embedding_dim // 2)      # (50, 128)
    diffusion_step = jax.random.randint(k5, (B,), 0, num_steps, dtype=jnp.int32)

    ref = _reference_forward(diffusion_step, embedding_table, w1, b1, w2, b2)

    # 1) Fused kernel, f32 MXU path (tight tolerance vs. reference).
    params_f32 = prepare_diffusion_embedding_params(
        embedding_table, w1, b1, w2, b2, matmul_dtype=jnp.float32)
    out_f32 = jax.block_until_ready(diffusion_embedding_forward(diffusion_step, params_f32))
    assert out_f32.shape == (B, projection_dim)
    assert jnp.allclose(out_f32, ref, atol=1e-4, rtol=1e-4)

    # 2) Fused kernel, default bf16 MXU operands / f32 accumulation+epilogue
    #    (precision trade-off documented: ~3 decimal digits on the embeddings).
    params_bf16 = prepare_diffusion_embedding_params(embedding_table, w1, b1, w2, b2)
    out_bf16 = jax.block_until_ready(diffusion_embedding_forward(diffusion_step, params_bf16))
    assert jnp.allclose(out_bf16, ref, atol=5e-2, rtol=5e-2)

    # 3) Precompute-all-steps kernel: per-step forward becomes a pure table lookup.
    all_steps = jax.block_until_ready(
        precompute_all_step_embeddings(embedding_table, w1, b1, w2, b2))
    assert all_steps.shape == (num_steps, projection_dim)
    assert jnp.allclose(all_steps[diffusion_step], ref, atol=1e-4, rtol=1e-4)

    print("KERNEL_OK")
</pallas_src>

<mosaic_0001>
module attributes {stable_mosaic.version = 11 : i64} {
  func.func @_fused_kernel(%arg0: memref<8x1xi32, #tpu.memory_space<vmem>>, %arg1: memref<56x128xf32, #tpu.memory_space<vmem>>, %arg2: memref<1x128xf32, #tpu.memory_space<vmem>>, %arg3: memref<128x128xf32, #tpu.memory_space<vmem>>, %arg4: memref<1x128xf32, #tpu.memory_space<vmem>>, %arg5: memref<8x128xf32, #tpu.memory_space<vmem>>) attributes {dimension_semantics = [], scalar_prefetch = 0 : i64, scratch_operands = 0 : i64, tpu.core_type = #tpu.core_type<tc>} {
    %c0 = arith.constant 0 : index
    %c0_0 = arith.constant 0 : index
    %0 = vector.load %arg0[%c0, %c0_0] : memref<8x1xi32, #tpu.memory_space<vmem>>, vector<8x1xi32>
    %c0_i32 = arith.constant 0 : i32
    %c49_i32 = arith.constant 49 : i32
    %1 = vector.broadcast %c0_i32 : i32 to vector<8x1xi32>
    %2 = arith.maxsi %1, %0 : vector<8x1xi32>
    %3 = vector.broadcast %c49_i32 : i32 to vector<8x1xi32>
    %4 = arith.minsi %3, %2 : vector<8x1xi32>
    %5 = tpu.iota {dimensions = array<i32: 1>} : vector<8x56xi32>
    %6 = vector.broadcast %4 : vector<8x1xi32> to vector<8x56xi32>
    %7 = arith.cmpi eq, %5, %6 : vector<8x56xi32>
    %8 = arith.extui %7 : vector<8x56xi1> to vector<8x56xi32>
    %9 = arith.sitofp %8 : vector<8x56xi32> to vector<8x56xf32>
    %c0_1 = arith.constant 0 : index
    %c0_2 = arith.constant 0 : index
    %10 = vector.load %arg1[%c0_1, %c0_2] : memref<56x128xf32, #tpu.memory_space<vmem>>, vector<56x128xf32>
    %cst = arith.constant dense<0.000000e+00> : vector<8x128xf32>
    %11 = tpu.matmul %9, %10, %cst {dimension_numbers = #tpu.dot_dimension_numbers<[1], [0], [0], [1], [0, 0, 1, 1], [], []>} : vector<8x56xf32>, vector<56x128xf32>, vector<8x128xf32> -> vector<8x128xf32>
    %c0_3 = arith.constant 0 : index
    %c0_4 = arith.constant 0 : index
    %12 = vector.load %arg2[%c0_3, %c0_4] : memref<1x128xf32, #tpu.memory_space<vmem>>, vector<1x128xf32>
    %13 = vector.broadcast %12 : vector<1x128xf32> to vector<8x128xf32>
    %14 = arith.addf %11, %13 : vector<8x128xf32>
    %15 = arith.negf %14 : vector<8x128xf32>
    %16 = math.exp %15 : vector<8x128xf32>
    %cst_5 = arith.constant 1.000000e+00 : f32
    %17 = vector.broadcast %cst_5 : f32 to vector<8x128xf32>
    %18 = arith.addf %17, %16 : vector<8x128xf32>
    %19 = arith.divf %17, %18 : vector<8x128xf32>
    %20 = arith.mulf %14, %19 : vector<8x128xf32>
    %c0_6 = arith.constant 0 : index
    %c0_7 = arith.constant 0 : index
    %21 = vector.load %arg3[%c0_6, %c0_7] : memref<128x128xf32, #tpu.memory_space<vmem>>, vector<128x128xf32>
    %cst_8 = arith.constant dense<0.000000e+00> : vector<8x128xf32>
    %22 = tpu.matmul %20, %21, %cst_8 {dimension_numbers = #tpu.dot_dimension_numbers<[1], [0], [0], [1], [0, 0, 1, 1], [], []>} : vector<8x128xf32>, vector<128x128xf32>, vector<8x128xf32> -> vector<8x128xf32>
    %c0_9 = arith.constant 0 : index
    %c0_10 = arith.constant 0 : index
    %23 = vector.load %arg4[%c0_9, %c0_10] : memref<1x128xf32, #tpu.memory_space<vmem>>, vector<1x128xf32>
    %24 = vector.broadcast %23 : vector<1x128xf32> to vector<8x128xf32>
    %25 = arith.addf %22, %24 : vector<8x128xf32>
    %26 = arith.negf %25 : vector<8x128xf32>
    %27 = math.exp %26 : vector<8x128xf32>
    %cst_11 = arith.constant 1.000000e+00 : f32
    %28 = vector.broadcast %cst_11 : f32 to vector<8x128xf32>
    %29 = arith.addf %28, %27 : vector<8x128xf32>
    %30 = arith.divf %28, %29 : vector<8x128xf32>
    %31 = arith.mulf %25, %30 : vector<8x128xf32>
    %c0_12 = arith.constant 0 : index
    %c0_13 = arith.constant 0 : index
    %32 = vector.load %arg5[%c0_12, %c0_13] : memref<8x128xf32, #tpu.memory_space<vmem>>, vector<8x128xf32>
    tpu.vector_store %arg5[%c0_12, %c0_13], %31 {strides = array<i32>} : memref<8x128xf32, #tpu.memory_space<vmem>>, vector<8x128xf32>,
    return
  }
}

</mosaic_0001>

<llo_original>
// kernel: tpu_custom_call.1
$region0: #{tpu_custom_call.1}
  #allocation0 [shape = 'u32[]', space=smem, size = 0x4, offset = 0x4, fixed_abs, tag = 'smem constant byte address 0x4 - core index']
  #allocation1 [shape = 'u32[144,128]{1,0:T(1,128)}', space=vmem, size = 0x12000, scoped, tag = 'internal scratch']
  %s0 = inlined_call_operand.vmem [shape: s32[8,1], index: 0, kind: input, shape index: {}]
  %s1 = inlined_call_operand.hbm [shape: f32[56,128], index: 1, kind: input, shape index: {}]
  %s2 = inlined_call_operand.vmem [shape: f32[1,128], index: 2, kind: input, shape index: {}]
  %s3 = inlined_call_operand.hbm [shape: f32[128,128], index: 3, kind: input, shape index: {}]
  %s4 = inlined_call_operand.vmem [shape: f32[1,128], index: 4, kind: input, shape index: {}]
  %s5 = inlined_call_operand.hbm [shape: f32[8,128], index: 5, kind: output, shape index: {}]
  %s6 = sld [smem:[#allocation0]]
  $region38: #{tpu_custom_call.1} parent=0
    _
  %s8 = ssub.s32 1, %s6
  %s9 = scalar_select 0, %s8, %s6
  $region1: #{tpu_custom_call.1} parent=0
    #allocation2 [shape = 'u8[28672]{0}', space=vmem, size = 0x7000, scoped, tag = 'input window, operand 1, single buffered']
    #allocation3 [shape = 's32[1]{0}', space=sflag, size = 0x4, scoped, tag = 'scoped memory for tpu_custom_call.1']
    #allocation4 [shape = 's32[1]{0}', space=sflag, size = 0x4, scoped, tag = 'scoped memory for tpu_custom_call.1']
    #allocation5 [shape = 'u8[65536]{0}', space=vmem, size = 0x10000, scoped, tag = 'input window, operand 3, single buffered']
    #allocation6 [shape = 's32[1]{0}', space=sflag, size = 0x4, scoped, tag = 'scoped memory for tpu_custom_call.1']
    #allocation7 [shape = 'u8[4096]{0}', space=vmem, size = 0x1000, scoped, tag = 'output window, operand 0, single buffered']
    %10 = vsyncpa [#allocation3], 0
    %11 = vsyncpa [#allocation6], 0
    %12 = vsyncpa [#allocation4], 0
    // Predicated region
    $region2: #{tpu_custom_call.1} parent=1 // pred_check
      _
    $region3: #{tpu_custom_call.1} parent=1 // pred_check_branch
      %14 = sbr.rel (0) target = $region5
    $region4: #{tpu_custom_call.1} parent=1 // pred_region
      _
    $region5: #{tpu_custom_call.1} parent=1 // pred_fallthru
      _
    // Predicated region
    $region6: #{tpu_custom_call.1} parent=1 // pred_check
      _
    $region7: #{tpu_custom_call.1} parent=1 // pred_check_branch
      %16 = sbr.rel (0) target = $region9
    $region8: #{tpu_custom_call.1} parent=1 // pred_region
      %s18 = ssub.s32 896, 896
      %19 = vsyncadd [#allocation3], %s18
      %s20 = sshll.u32 [#allocation2], 4
      %s21 = int_to_ptr.vmem [resolvable:$true] %s20
      %26 = dma.hbm_to_vmem [thread:$0]  %s1, 896, %s21, [#allocation3], 128, 128, 8
    $region9: #{tpu_custom_call.1} parent=1 // pred_fallthru
      _
    // Predicated region
    $region10: #{tpu_custom_call.1} parent=1 // pred_check
      _
    $region11: #{tpu_custom_call.1} parent=1 // pred_check_branch
      %28 = sbr.rel (0) target = $region13
    $region12: #{tpu_custom_call.1} parent=1 // pred_region
      _
    $region13: #{tpu_custom_call.1} parent=1 // pred_fallthru
      _
    // Predicated region
    $region14: #{tpu_custom_call.1} parent=1 // pred_check
      _
    $region15: #{tpu_custom_call.1} parent=1 // pred_check_branch
      %30 = sbr.rel (0) target = $region17
    $region16: #{tpu_custom_call.1} parent=1 // pred_region
      %s32 = ssub.s32 2048, 2048
      %33 = vsyncadd [#allocation6], %s32
      %s34 = sshll.u32 [#allocation5], 4
      %s35 = int_to_ptr.vmem [resolvable:$true] %s34
      %40 = dma.hbm_to_vmem [thread:$0]  %s3, 2048, %s35, [#allocation6], 128, 128, 8
    $region17: #{tpu_custom_call.1} parent=1 // pred_fallthru
      _
    // Predicated region
    $region18: #{tpu_custom_call.1} parent=1 // pred_check
      _
    $region19: #{tpu_custom_call.1} parent=1 // pred_check_branch
      %42 = sbr.rel (0) target = $region21
    $region20: #{tpu_custom_call.1} parent=1 // pred_region
      _
    $region21: #{tpu_custom_call.1} parent=1 // pred_fallthru
      _
    // Predicated region
    $region22: #{tpu_custom_call.1} parent=1 // pred_check
      _
    $region23: #{tpu_custom_call.1} parent=1 // pred_check_branch
      %44 = sbr.rel (0) target = $region25
    $region24: #{tpu_custom_call.1} parent=1 // pred_region
      %45 = dma.done [#allocation3], 896
    $region25: #{tpu_custom_call.1} parent=1 // pred_fallthru
      _
    // Predicated region
    $region26: #{tpu_custom_call.1} parent=1 // pred_check
      _
    $region27: #{tpu_custom_call.1} parent=1 // pred_check_branch
      %47 = sbr.rel (0) target = $region29
    $region28: #{tpu_custom_call.1} parent=1 // pred_region
      %48 = dma.done [#allocation6], 2048
    $region29: #{tpu_custom_call.1} parent=1 // pred_fallthru
      _
    %v49 = vld [vmem:[%s0] sm:$0xff]
    %vm50 = vcmp.gt.s32.totalorder %v49, 0
    %v51 = vsel %vm50, %v49, 0
    %vm52 = vcmp.lt.s32.totalorder %v51, 49
    %v53 = vsel %vm52, %v51, 49
    %v54 = vlaneseq
    %v55 = vand.u32 %v54, 127
    %56 = vset.pattern.permute.xlu0 0
    %57 = vperm.xlu0 %56, %v53
    %v58 = vpop.permute.xlu0 %57
    %vm59 = vcmp.eq.s32.totalorder %v55, %v58
    %v60 = vsel %vm59, 1, 0
    %v61 = vcvt.s32.f32 %v60
    %v62 = vld [vmem:[#allocation2] sm:$0xff]
    %v63 = vld [vmem:[#allocation2 + $0x8] sm:$0xff]
    %v64 = vld [vmem:[#allocation2 + $0x10] sm:$0xff]
    %v65 = vld [vmem:[#allocation2 + $0x18] sm:$0xff]
    %v66 = vld [vmem:[#allocation2 + $0x20] sm:$0xff]
    %v67 = vld [vmem:[#allocation2 + $0x28] sm:$0xff]
    %v68 = vld [vmem:[#allocation2 + $0x30] sm:$0xff]
    %v69 = vld [vmem:[%s2] sm:$0x1]
    %v71 = vlaneseq
    %v72 = vshrl.u32 %v71, 7
    %v73 = vsub.s32 0, %v72
    %v74 = vrot.slane %v69, %v73
    %vm76 = vcmask 457728
    %v78 = vsel %vm76, %v61, 0
    %80 = vmatprep.subr.mxu0 0.0
    %81 = vmatpush1.msra.mxu0 0.0
    %82 = vmatprep.subr.mxu0 0.0
    %83 = vmatpush1.msra.mxu0 0.0
    %84 = vmatprep.subr.mxu0 0.0
    %85 = vmatpush1.msra.mxu0 0.0
    %86 = vmatprep.subr.mxu0 0.0
    %87 = vmatpush1.msra.mxu0 0.0
    %88 = vmatprep.subr.mxu0 0.0
    %89 = vmatpush1.msra.mxu0 0.0
    %90 = vmatprep.subr.mxu0 0.0
    %91 = vmatpush1.msra.mxu0 0.0
    %92 = vmatprep.subr.mxu0 0.0
    %93 = vmatpush1.msra.mxu0 0.0
    %94 = vmatprep.subr.mxu0 0.0
    %95 = vmatpush1.msra.mxu0 0.0
    %96 = vmatprep.subr.mxu0 0.0
    %97 = vmatpush1.msra.mxu0 0.0
    %98 = vmatprep.subr.mxu0 0.0
    %99 = vmatpush1.msra.mxu0 %v68
    %100 = vmatprep.subr.mxu0 0.0
    %101 = vmatpush1.msra.mxu0 %v67
    %102 = vmatprep.subr.mxu0 0.0
    %103 = vmatpush1.msra.mxu0 %v66
    %104 = vmatprep.subr.mxu0 0.0
    %105 = vmatpush1.msra.mxu0 %v65
    %106 = vmatprep.subr.mxu0 0.0
    %107 = vmatpush1.msra.mxu0 %v64
    %108 = vmatprep.subr.mxu0 0.0
    %109 = vmatpush1.msra.mxu0 %v63
    %110 = vmatprep.subr.mxu0 0.0
    %111 = vmatpush1.msra.mxu0 %v62
    %112 = vmatprep.subr.mxu0 0.0
    %113 = vmatpush2.msra.mxu0 0.0
    %114 = vmatprep.subr.mxu0 0.0
    %115 = vmatpush2.msra.mxu0 0.0
    %116 = vmatprep.subr.mxu0 0.0
    %117 = vmatpush2.msra.mxu0 0.0
    %118 = vmatprep.subr.mxu0 0.0
    %119 = vmatpush2.msra.mxu0 0.0
    %120 = vmatprep.subr.mxu0 0.0
    %121 = vmatpush2.msra.mxu0 0.0
    %122 = vmatprep.subr.mxu0 0.0
    %123 = vmatpush2.msra.mxu0 0.0
    %124 = vmatprep.subr.mxu0 0.0
    %125 = vmatpush2.msra.mxu0 0.0
    %126 = vmatprep.subr.mxu0 0.0
    %127 = vmatpush2.msra.mxu0 0.0
    %128 = vmatprep.subr.mxu0 0.0
    %129 = vmatpush2.msra.mxu0 0.0
    %130 = vmatprep.subr.mxu0 0.0
    %131 = vmatpush2.msra.mxu0 0.0
    %132 = vmatprep.subr.mxu0 0.0
    %133 = vmatpush2.msra.mxu0 0.0
    %134 = vmatprep.subr.mxu0 0.0
    %135 = vmatpush2.msra.mxu0 0.0
    %136 = vmatprep.subr.mxu0 0.0
    %137 = vmatpush2.msra.mxu0 0.0
    %138 = vmatprep.subr.mxu0 0.0
    %139 = vmatpush2.msra.mxu0 0.0
    %140 = vmatprep.subr.mxu0 0.0
    %141 = vmatpush2.msra.mxu0 0.0
    %142 = vmatprep.subr.mxu0 0.0
    %143 = vmatpush2.msra.mxu0 0.0
    %144 = vmatprep.mubr.f32.mxu0 0.0
    %145 = vmatmul.mubr.f32.gmra.mxu0 %v78
    %v146 = vpop.f32.mrf.mxu0
    %v147 = vadd.f32 %v74, %v146
    %v148 = vpop.f32.mrf.mxu0
    %149 = vdwg.mxu0
    %v150 = vxor.u32 %v147, 2147483648
    %v151 = vmul.f32 %v150, 1.442695
    %v152 = vpow.pop %v151
    %v153 = vadd.f32 %v152, 1.0
    %v154 = vrcp.pop %v153
    %v155 = vmul.f32 1.0, %v154
    %v156 = vmul.f32 %v147, %v155
    %v157 = vld [vmem:[#allocation5] sm:$0xff]
    %v158 = vld [vmem:[#allocation5 + $0x8] sm:$0xff]
    %v159 = vld [vmem:[#allocation5 + $0x10] sm:$0xff]
    %v160 = vld [vmem:[#allocation5 + $0x18] sm:$0xff]
    %v161 = vld [vmem:[#allocation5 + $0x20] sm:$0xff]
    %v162 = vld [vmem:[#allocation5 + $0x28] sm:$0xff]
    %v163 = vld [vmem:[#allocation5 + $0x30] sm:$0xff]
    %v164 = vld [vmem:[#allocation5 + $0x38] sm:$0xff]
    %v165 = vld [vmem:[#allocation5 + $0x40] sm:$0xff]
    %v166 = vld [vmem:[#allocation5 + $0x48] sm:$0xff]
    %v167 = vld [vmem:[#allocation5 + $0x50] sm:$0xff]
    %v168 = vld [vmem:[#allocation5 + $0x58] sm:$0xff]
    %v169 = vld [vmem:[#allocation5 + $0x60] sm:$0xff]
    %v170 = vld [vmem:[#allocation5 + $0x68] sm:$0xff]
    %v171 = vld [vmem:[#allocation5 + $0x70] sm:$0xff]
    %v172 = vld [vmem:[#allocation5 + $0x78] sm:$0xff]
    %v173 = vld [vmem:[%s4] sm:$0x1]
    %v175 = vlaneseq
    %v176 = vshrl.u32 %v175, 7
    %v177 = vsub.s32 0, %v176
    %v178 = vrot.slane %v173, %v177
    %180 = vmatprep.subr.mxu0 0.0
    %181 = vmatpush1.msra.mxu0 %v172
    %182 = vmatprep.subr.mxu0 0.0
    %183 = vmatpush1.msra.mxu0 %v171
    %184 = vmatprep.subr.mxu0 0.0
    %185 = vmatpush1.msra.mxu0 %v170
    %186 = vmatprep.subr.mxu0 0.0
    %187 = vmatpush1.msra.mxu0 %v169
    %188 = vmatprep.subr.mxu0 0.0
    %189 = vmatpush1.msra.mxu0 %v168
    %190 = vmatprep.subr.mxu0 0.0
    %191 = vmatpush1.msra.mxu0 %v167
    %192 = vmatprep.subr.mxu0 0.0
    %193 = vmatpush1.msra.mxu0 %v166
    %194 = vmatprep.subr.mxu0 0.0
    %195 = vmatpush1.msra.mxu0 %v165
    %196 = vmatprep.subr.mxu0 0.0
    %197 = vmatpush1.msra.mxu0 %v164
    %198 = vmatprep.subr.mxu0 0.0
    %199 = vmatpush1.msra.mxu0 %v163
    %200 = vmatprep.subr.mxu0 0.0
    %201 = vmatpush1.msra.mxu0 %v162
    %202 = vmatprep.subr.mxu0 0.0
    %203 = vmatpush1.msra.mxu0 %v161
    %204 = vmatprep.subr.mxu0 0.0
    %205 = vmatpush1.msra.mxu0 %v160
    %206 = vmatprep.subr.mxu0 0.0
    %207 = vmatpush1.msra.mxu0 %v159
    %208 = vmatprep.subr.mxu0 0.0
    %209 = vmatpush1.msra.mxu0 %v158
    %210 = vmatprep.subr.mxu0 0.0
    %211 = vmatpush1.msra.mxu0 %v157
    %212 = vmatprep.subr.mxu0 0.0
    %213 = vmatpush2.msra.mxu0 0.0
    %214 = vmatprep.subr.mxu0 0.0
    %215 = vmatpush2.msra.mxu0 0.0
    %216 = vmatprep.subr.mxu0 0.0
    %217 = vmatpush2.msra.mxu0 0.0
    %218 = vmatprep.subr.mxu0 0.0
    %219 = vmatpush2.msra.mxu0 0.0
    %220 = vmatprep.subr.mxu0 0.0
    %221 = vmatpush2.msra.mxu0 0.0
    %222 = vmatprep.subr.mxu0 0.0
    %223 = vmatpush2.msra.mxu0 0.0
    %224 = vmatprep.subr.mxu0 0.0
    %225 = vmatpush2.msra.mxu0 0.0
    %226 = vmatprep.subr.mxu0 0.0
    %227 = vmatpush2.msra.mxu0 0.0
    %228 = vmatprep.subr.mxu0 0.0
    %229 = vmatpush2.msra.mxu0 0.0
    %230 = vmatprep.subr.mxu0 0.0
    %231 = vmatpush2.msra.mxu0 0.0
    %232 = vmatprep.subr.mxu0 0.0
    %233 = vmatpush2.msra.mxu0 0.0
    %234 = vmatprep.subr.mxu0 0.0
    %235 = vmatpush2.msra.mxu0 0.0
    %236 = vmatprep.subr.mxu0 0.0
    %237 = vmatpush2.msra.mxu0 0.0
    %238 = vmatprep.subr.mxu0 0.0
    %239 = vmatpush2.msra.mxu0 0.0
    %240 = vmatprep.subr.mxu0 0.0
    %241 = vmatpush2.msra.mxu0 0.0
    %242 = vmatprep.subr.mxu0 0.0
    %243 = vmatpush2.msra.mxu0 0.0
    %244 = vmatprep.mubr.f32.mxu0 0.0
    %245 = vmatmul.mubr.f32.gmra.mxu0 %v156
    %v246 = vpop.f32.mrf.mxu0
    %v247 = vadd.f32 %v178, %v246
    %v248 = vpop.f32.mrf.mxu0
    %249 = vdwg.mxu0
    %v250 = vxor.u32 %v247, 2147483648
    %v251 = vmul.f32 %v250, 1.442695
    %v252 = vpow.pop %v251
    %v253 = vadd.f32 %v252, 1.0
    %v254 = vrcp.pop %v253
    %v255 = vmul.f32 1.0, %v254
    %v256 = vmul.f32 %v247, %v255
    %257 = vst [vmem:[#allocation7] sm:$0xff] %v256
    // Predicated region
    $region30: #{tpu_custom_call.1} parent=1 // pred_check
      _
    $region31: #{tpu_custom_call.1} parent=1 // pred_check_branch
      %259 = sbr.rel (0) target = $region33
    $region32: #{tpu_custom_call.1} parent=1 // pred_region
      %s261 = ssub.s32 128, 128
      %262 = vsyncadd [#allocation4], %s261
      %s264 = sshll.u32 [#allocation7], 4
      %s265 = int_to_ptr.vmem [resolvable:$true] %s264
      %267 = dma.vmem_to_hbm [thread:$0]  %s265, 128, %s5, [#allocation4]
    $region33: #{tpu_custom_call.1} parent=1 // pred_fallthru
      _
    // Predicated region
    $region34: #{tpu_custom_call.1} parent=1 // pred_check
      _
    $region35: #{tpu_custom_call.1} parent=1 // pred_check_branch
      %269 = sbr.rel (0) target = $region37
    $region36: #{tpu_custom_call.1} parent=1 // pred_region
      %270 = dma.done [#allocation4], 128
    $region37: #{tpu_custom_call.1} parent=1 // pred_fallthru
      _
    %271 = vsyncpa [#allocation3], 1
    %272 = vsyncpa [#allocation6], 1
    %273 = vsyncpa [#allocation4], 1

</llo_original>
